<compile_context>
chip_gen: v7x
topology: tpu7x:2x2x1
jax: 0.10.0
libtpu: 0.0.40
codegen_flags: <defaults>
</compile_context>

<pallas_src>
import functools

import numpy as np
import jax
import jax.numpy as jnp
from jax import lax
from jax.experimental import pallas as pl
from jax.experimental.pallas import tpu as pltpu


def _segment_embedding_kernel(ids_ref, table_ref, out_ref):
    # ids_ref:   (1, T)       int32  lane-dense tile of flattened token ids
    # table_ref: (K_pad, Dt)  embedding-table chunk (VMEM-resident across tokens)
    # out_ref:   (T, Dt)      output tile
    ids = ids_ref[0, :]                                      # (T,)
    k_pad = table_ref.shape[0]
    t = ids.shape[0]
    # One-hot along the (padded) segment-id axis: (K_pad, T).
    seg_iota = lax.broadcasted_iota(jnp.int32, (k_pad, t), 0)
    onehot = (seg_iota == ids[None, :]).astype(table_ref.dtype)
    # (T, Dt) = onehot^T @ table -- contract K_pad on the MXU.
    out_ref[...] = lax.dot_general(
        onehot, table_ref[...],
        dimension_numbers=(((0,), (0,)), ((), ())),
        preferred_element_type=jnp.float32,
    ).astype(out_ref.dtype)


def _round_up(x, m):
    return ((x + m - 1) // m) * m


@functools.partial(jax.jit, static_argnames=("token_tile", "out_dtype"))
def segment_embedding(segment_ids, embed_weight, *, token_tile=2048,
                      out_dtype=jnp.float32):
    """segment_ids: (B, S) int; embed_weight: (max_segment, d_emb) float32."""
    b, s = segment_ids.shape
    max_segment, d_emb = embed_weight.shape
    n = b * s
    n8 = _round_up(n, 8)

    # --- table prep ----------------------------------------------------------
    # bf16 output => bf16 table (single-pass MXU matmul, halves write traffic).
    table_dtype = jnp.bfloat16 if out_dtype == jnp.bfloat16 else embed_weight.dtype
    k_pad = _round_up(max_segment, 32)
    d_work = d_emb if d_emb >= 128 else 128      # keep output stores lane-dense
    table = jnp.zeros((k_pad, d_work), table_dtype)
    table = table.at[:max_segment, :d_emb].set(embed_weight.astype(table_dtype))

    # --- feature (d) tiling --------------------------------------------------
    if d_work <= 512:
        d_tile = d_work
    elif d_work % 512 == 0:
        d_tile = 512
    elif d_work % 256 == 0:
        d_tile = 256
    elif d_work % 128 == 0:
        d_tile = 128
    else:
        d_tile = d_work                           # odd wide width: full-dim block

    # --- token tiling --------------------------------------------------------
    req = max(128, (token_tile // 128) * 128)     # lane-dense multiple of 128
    if n8 <= req:
        if n8 >= 1024:
            # Split into >=2 parallel steps (>=512 each) so v7x's 2 TensorCores
            # both get work instead of collapsing to a single token block.
            tile_t = max(512, _round_up(-(-n8 // 2), 128))
        else:
            tile_t = n8                           # small input: one full block
    else:
        tile_t = req

    # --- VMEM budget guard (v7x: 32 MiB scoped / 64 MiB physical per TC) -----
    out_bytes = np.dtype(out_dtype).itemsize
    tbl_bytes = np.dtype(table_dtype).itemsize

    def vmem_est(tt):
        return (2 * tt * d_tile * out_bytes       # double-buffered output blocks
                + 2 * k_pad * d_tile * tbl_bytes  # double-buffered table blocks
                + 2 * tt * 4                      # double-buffered ids blocks
                + k_pad * tt * tbl_bytes          # one-hot intermediate
                + tt * d_tile * 4)                # f32 matmul result

    budget = 24 * 1024 * 1024
    while vmem_est(tile_t) > budget and tile_t > 128:
        tile_t = max(128, ((tile_t // 2) // 128) * 128)

    grid_t = -(-n8 // tile_t)                     # ragged last block is masked
    grid_d = d_work // d_tile

    # --- ids as a lane-dense (1, N8) row -------------------------------------
    ids_row = segment_ids.reshape(1, n).astype(jnp.int32)
    if n8 != n:
        ids_row = jnp.pad(ids_row, ((0, 0), (0, n8 - n)))   # 0 is a valid index

    out_flat = pl.pallas_call(
        _segment_embedding_kernel,
        out_shape=jax.ShapeDtypeStruct((n8, d_work), out_dtype),
        grid_spec=pltpu.PrefetchScalarGridSpec(
            num_scalar_prefetch=0,
            grid=(grid_d, grid_t),                # d OUTER, tokens INNER
            in_specs=[
                # ids: tiny block, re-fetched along the inner token axis.
                pl.BlockSpec((1, tile_t), lambda j, i: (0, i)),
                # table: block index constant along the inner axis -> resident.
                pl.BlockSpec((k_pad, d_tile), lambda j, i: (0, j)),
            ],
            out_specs=pl.BlockSpec((tile_t, d_tile), lambda j, i: (i, j)),
        ),
        compiler_params=pltpu.CompilerParams(
            dimension_semantics=("parallel", "parallel"),
            vmem_limit_bytes=32 * 1024 * 1024),
    )(ids_row, table)

    if n8 != n or d_work != d_emb:
        # TODO(synk): this slice is an extra (n, d_emb) HBM copy; only hit when
        # B*S is not a multiple of 8 or d_emb < 128.
        out_flat = out_flat[:n, :d_emb]
    return out_flat.reshape(b, s, d_emb)


if __name__ == "__main__":
    B, S = 2, 8
    D_EMB = 128
    MAX_SEGMENT = 20

    key = jax.random.PRNGKey(0)
    k_w, k_ids = jax.random.split(key)

    # nn.init.normal_(weight, mean=0, std=1/sqrt(d_emb))
    embed_weight = (jax.random.normal(k_w, (MAX_SEGMENT, D_EMB), jnp.float32)
                    * (1.0 / D_EMB ** 0.5))
    segment_ids = jax.random.randint(k_ids, (B, S), 0, MAX_SEGMENT, jnp.int32)

    out = segment_embedding(segment_ids, embed_weight)
    jax.block_until_ready(out)

    # Reference: plain JAX gather (same semantics as torch nn.Embedding).
    ref = jnp.take(embed_weight, segment_ids, axis=0)
    assert out.shape == (B, S, D_EMB)
    assert out.dtype == jnp.float32
    assert jnp.allclose(out, ref, atol=1e-6), "mismatch vs reference gather"

    # Non-multiple-of-8 token count (pad + trim path).
    ids_odd = jax.random.randint(jax.random.PRNGKey(1), (3, 7), 0, MAX_SEGMENT,
                                 jnp.int32)
    out_odd = segment_embedding(ids_odd, embed_weight)
    jax.block_until_ready(out_odd)
    ref_odd = jnp.take(embed_weight, ids_odd, axis=0)
    assert jnp.allclose(out_odd, ref_odd, atol=1e-6), "mismatch (odd shape)"

    # bf16 fast path on a larger token count (exercises the >=2-step token
    # split, ragged last block, and the bf16 table / single-pass MXU path).
    ids_big = jax.random.randint(jax.random.PRNGKey(2), (4, 300), 0, MAX_SEGMENT,
                                 jnp.int32)
    out_bf16 = segment_embedding(ids_big, embed_weight, out_dtype=jnp.bfloat16)
    jax.block_until_ready(out_bf16)
    ref_big = jnp.take(embed_weight, ids_big, axis=0)
    assert out_bf16.dtype == jnp.bfloat16
    assert jnp.allclose(out_bf16.astype(jnp.float32), ref_big,
                        atol=2e-2, rtol=2e-2), "mismatch (bf16 path)"

    print("KERNEL_OK")
</pallas_src>

<mosaic_0001>
module attributes {stable_mosaic.version = 11 : i64} {
  func.func @_segment_embedding_kernel(%arg0: i32, %arg1: i32, %arg2: memref<1x16xi32, #tpu.memory_space<vmem>>, %arg3: memref<32x128xf32, #tpu.memory_space<vmem>>, %arg4: memref<16x128xf32, #tpu.memory_space<vmem>>) attributes {dimension_semantics = [#tpu.dimension_semantics<parallel>, #tpu.dimension_semantics<parallel>], iteration_bounds = array<i64: 1, 1>, scalar_prefetch = 0 : i64, scratch_operands = 0 : i64, tpu.core_type = #tpu.core_type<tc>, window_params = [{transform_indices = @transform_0, window_bounds = array<i64: 1, 16>}, {transform_indices = @transform_1, window_bounds = array<i64: 32, 128>}, {transform_indices = @transform_2, window_bounds = array<i64: 16, 128>}]} {
    %c0 = arith.constant 0 : index
    %c0_0 = arith.constant 0 : index
    %0 = vector.load %arg2[%c0, %c0_0] : memref<1x16xi32, #tpu.memory_space<vmem>>, vector<1x16xi32>
    %1 = vector.shape_cast %0 : vector<1x16xi32> to vector<16xi32>
    %2 = tpu.iota {dimensions = array<i32: 0>} : vector<32x16xi32>
    %3 = vector.shape_cast %1 : vector<16xi32> to vector<1x16xi32>
    %4 = vector.broadcast %3 : vector<1x16xi32> to vector<32x16xi32>
    %5 = arith.cmpi eq, %2, %4 : vector<32x16xi32>
    %6 = arith.extui %5 : vector<32x16xi1> to vector<32x16xi32>
    %7 = arith.sitofp %6 : vector<32x16xi32> to vector<32x16xf32>
    %c0_1 = arith.constant 0 : index
    %c0_2 = arith.constant 0 : index
    %8 = vector.load %arg3[%c0_1, %c0_2] : memref<32x128xf32, #tpu.memory_space<vmem>>, vector<32x128xf32>
    %cst = arith.constant dense<0.000000e+00> : vector<16x128xf32>
    %9 = tpu.matmul %7, %8, %cst {dimension_numbers = #tpu.dot_dimension_numbers<[0], [0], [1], [1], [0, 1, 1, 1], [], []>} : vector<32x16xf32>, vector<32x128xf32>, vector<16x128xf32> -> vector<16x128xf32>
    %c0_3 = arith.constant 0 : index
    %c0_4 = arith.constant 0 : index
    %10 = vector.load %arg4[%c0_3, %c0_4] : memref<16x128xf32, #tpu.memory_space<vmem>>, vector<16x128xf32>
    tpu.vector_store %arg4[%c0_3, %c0_4], %9 {strides = array<i32>} : memref<16x128xf32, #tpu.memory_space<vmem>>, vector<16x128xf32>,
    return
  }
  func.func @transform_0(%arg0: i32, %arg1: i32) -> (i32, i32) {
    %c0_i32 = arith.constant 0 : i32
    %c0_i32_0 = arith.constant 0 : i32
    return %c0_i32, %arg1 : i32, i32
  }
  func.func @transform_1(%arg0: i32, %arg1: i32) -> (i32, i32) {
    %c0_i32 = arith.constant 0 : i32
    %c0_i32_0 = arith.constant 0 : i32
    return %c0_i32, %arg0 : i32, i32
  }
  func.func @transform_2(%arg0: i32, %arg1: i32) -> (i32, i32) {
    %c0_i32 = arith.constant 0 : i32
    return %arg1, %arg0 : i32, i32
  }
}

</mosaic_0001>

<llo_original>
// kernel: segment_embedding.1
$region0: #{segment_embedding.1}
  #allocation0 [shape = 'u32[]', space=smem, size = 0x4, offset = 0x4, fixed_abs, tag = 'smem constant byte address 0x4 - core index']
  #allocation1 [shape = 'u32[144,128]{1,0:T(1,128)}', space=vmem, size = 0x12000, scoped, tag = 'internal scratch']
  %s0 = inlined_call_operand.vmem [shape: s32[1,16], index: 0, kind: input, shape index: {}]
  %s1 = inlined_call_operand.vmem [shape: f32[32,128], index: 1, kind: input, shape index: {}]
  %s2 = inlined_call_operand.hbm [shape: f32[16,128], index: 2, kind: output, shape index: {}]
  %s3 = sld [smem:[#allocation0]]
  $region18: #{segment_embedding.1} parent=0
    _
  %s5 = ssub.s32 1, %s3
  %s6 = scalar_select 0, %s5, %s3
  $region1: #{segment_embedding.1} parent=0
    #allocation2 [shape = 'u8[8192]{0}', space=vmem, size = 0x2000, scoped, tag = 'output window, operand 0, single buffered']
    #allocation3 [shape = 's32[1]{0}', space=sflag, size = 0x4, scoped, tag = 'scoped memory for segment_embedding.1']
    %7 = vsyncpa [#allocation3], 0
    // Predicated region
    $region2: #{segment_embedding.1} parent=1 // pred_check
      _
    $region3: #{segment_embedding.1} parent=1 // pred_check_branch
      %9 = sbr.rel (0) target = $region5
    $region4: #{segment_embedding.1} parent=1 // pred_region
      _
    $region5: #{segment_embedding.1} parent=1 // pred_fallthru
      _
    // Predicated region
    $region6: #{segment_embedding.1} parent=1 // pred_check
      _
    $region7: #{segment_embedding.1} parent=1 // pred_check_branch
      %11 = sbr.rel (0) target = $region9
    $region8: #{segment_embedding.1} parent=1 // pred_region
      _
    $region9: #{segment_embedding.1} parent=1 // pred_fallthru
      _
    %v12 = vld [vmem:[%s0] sm:$0x1]
    %v13 = vlaneseq
    %v14 = vshrl.u32 %v13, 7
    %v15 = vadd.s32 %v14, 8
    %v16 = vadd.s32 %v14, 16
    %v17 = vadd.s32 %v14, 24
    %v18 = vlaneseq
    %v19 = vshrl.u32 %v18, 7
    %v20 = vsub.s32 0, %v19
    %v21 = vrot.slane %v12, %v20
    %vm22 = vcmp.eq.s32.totalorder %v14, %v21
    %vm23 = vcmp.eq.s32.totalorder %v15, %v21
    %vm24 = vcmp.eq.s32.totalorder %v16, %v21
    %vm25 = vcmp.eq.s32.totalorder %v17, %v21
    %v26 = vsel %vm22, 1, 0
    %v27 = vsel %vm23, 1, 0
    %v28 = vsel %vm24, 1, 0
    %v29 = vsel %vm25, 1, 0
    %v30 = vcvt.s32.f32 %v26
    %v31 = vcvt.s32.f32 %v27
    %v32 = vcvt.s32.f32 %v28
    %v33 = vcvt.s32.f32 %v29
    %v34 = vld [vmem:[%s1] sm:$0xff]
    %v35 = vld [vmem:[%s1 + $0x8] sm:$0xff]
    %v36 = vld [vmem:[%s1 + $0x10] sm:$0xff]
    %v37 = vld [vmem:[%s1 + $0x18] sm:$0xff]
    %38 = vxpose.xlu0.b32.start [1/16] %v30, 128
    %39 = vxpose.xlu0.b32.cont [2/16] %v31, 128
    %40 = vxpose.xlu0.b32.cont [3/16] %v32, 128
    %41 = vxpose.xlu0.b32.cont [4/16] %v33, 128
    %42 = vxpose.xlu0.b32.cont [5/16] 0.0, 128
    %43 = vxpose.xlu0.b32.cont [6/16] 0.0, 128
    %44 = vxpose.xlu0.b32.cont [7/16] 0.0, 128
    %45 = vxpose.xlu0.b32.cont [8/16] 0.0, 128
    %46 = vxpose.xlu0.b32.cont [9/16] 0.0, 128
    %47 = vxpose.xlu0.b32.cont [10/16] 0.0, 128
    %48 = vxpose.xlu0.b32.cont [11/16] 0.0, 128
    %49 = vxpose.xlu0.b32.cont [12/16] 0.0, 128
    %50 = vxpose.xlu0.b32.cont [13/16] 0.0, 128
    %51 = vxpose.xlu0.b32.cont [14/16] 0.0, 128
    %52 = vxpose.xlu0.b32.cont [15/16] 0.0, 128
    %53 = vxpose.xlu0.b32.end [16/16] 0.0, 128
    %v54 = vpop.trf.xlu0
    %v55 = vpop.trf.xlu0
    %v56 = vpop.trf.xlu0
    %v57 = vpop.trf.xlu0
    %v58 = vpop.trf.xlu0
    %v59 = vpop.trf.xlu0
    %v60 = vpop.trf.xlu0
    %v61 = vpop.trf.xlu0
    %v62 = vpop.trf.xlu0
    %v63 = vpop.trf.xlu0
    %v64 = vpop.trf.xlu0
    %v65 = vpop.trf.xlu0
    %v66 = vpop.trf.xlu0
    %v67 = vpop.trf.xlu0
    %v68 = vpop.trf.xlu0
    %v69 = vpop.trf.xlu0
    %vm70 = vcmask 261120
    %v72 = vsel %vm70, %v54, 0
    %v75 = vsel %vm70, %v55, 0
    %77 = vmatprep.subr.mxu0 0.0
    %78 = vmatpush1.msra.mxu0 %v34
    %79 = vmatprep.subr.mxu0 0.0
    %80 = vmatpush1.msra.mxu0 %v35
    %81 = vmatprep.subr.mxu0 0.0
    %82 = vmatpush1.msra.mxu0 %v36
    %83 = vmatprep.subr.mxu0 0.0
    %84 = vmatpush1.msra.mxu0 %v37
    %85 = vmatprep.subr.mxu0 0.0
    %86 = vmatpush1.msra.mxu0 0.0
    %87 = vmatprep.subr.mxu0 0.0
    %88 = vmatpush1.msra.mxu0 0.0
    %89 = vmatprep.subr.mxu0 0.0
    %90 = vmatpush1.msra.mxu0 0.0
    %91 = vmatprep.subr.mxu0 0.0
    %92 = vmatpush1.msra.mxu0 0.0
    %93 = vmatprep.subr.mxu0 0.0
    %94 = vmatpush1.msra.mxu0 0.0
    %95 = vmatprep.subr.mxu0 0.0
    %96 = vmatpush1.msra.mxu0 0.0
    %97 = vmatprep.subr.mxu0 0.0
    %98 = vmatpush1.msra.mxu0 0.0
    %99 = vmatprep.subr.mxu0 0.0
    %100 = vmatpush1.msra.mxu0 0.0
    %101 = vmatprep.subr.mxu0 0.0
    %102 = vmatpush1.msra.mxu0 0.0
    %103 = vmatprep.subr.mxu0 0.0
    %104 = vmatpush1.msra.mxu0 0.0
    %105 = vmatprep.subr.mxu0 0.0
    %106 = vmatpush1.msra.mxu0 0.0
    %107 = vmatprep.subr.mxu0 0.0
    %108 = vmatpush1.msra.mxu0 0.0
    %109 = vmatprep.subr.mxu0 0.0
    %110 = vmatpush1.msra.mxu0 0.0
    %111 = vmatprep.subr.mxu0 0.0
    %112 = vmatpush1.msra.mxu0 0.0
    %113 = vmatprep.subr.mxu0 0.0
    %114 = vmatpush1.msra.mxu0 0.0
    %115 = vmatprep.subr.mxu0 0.0
    %116 = vmatpush1.msra.mxu0 0.0
    %117 = vmatprep.subr.mxu0 0.0
    %118 = vmatpush1.msra.mxu0 0.0
    %119 = vmatprep.subr.mxu0 0.0
    %120 = vmatpush1.msra.mxu0 0.0
    %121 = vmatprep.subr.mxu0 0.0
    %122 = vmatpush1.msra.mxu0 0.0
    %123 = vmatprep.subr.mxu0 0.0
    %124 = vmatpush1.msra.mxu0 0.0
    %125 = vmatprep.subr.mxu0 0.0
    %126 = vmatpush1.msra.mxu0 0.0
    %127 = vmatprep.subr.mxu0 0.0
    %128 = vmatpush1.msra.mxu0 0.0
    %129 = vmatprep.subr.mxu0 0.0
    %130 = vmatpush1.msra.mxu0 0.0
    %131 = vmatprep.subr.mxu0 0.0
    %132 = vmatpush1.msra.mxu0 0.0
    %133 = vmatprep.subr.mxu0 0.0
    %134 = vmatpush1.msra.mxu0 0.0
    %135 = vmatprep.subr.mxu0 0.0
    %136 = vmatpush1.msra.mxu0 0.0
    %137 = vmatprep.subr.mxu0 0.0
    %138 = vmatpush1.msra.mxu0 0.0
    %139 = vmatprep.subr.mxu0 0.0
    %140 = vmatpush1.msra.mxu0 0.0
    %141 = vmatprep.mubr.f32.mxu0 0.0
    %142 = vmatmul.mubr.f32.gmra.mrb[0].mxu0 %v72
    %v143 = vpop.f32.mrb[0].mxu0
    %v144 = vadd.f32 0.0, %v143
    %v145 = vpop.f32.mrb[0].mxu0
    %146 = vmatprep.mubr.f32.mxu0 0.0
    %147 = vmatmul.mubr.f32.gmra.mrb[0].mxu0 %v75
    %v148 = vpop.f32.mrb[0].mxu0
    %v149 = vadd.f32 0.0, %v148
    %v150 = vpop.f32.mrb[0].mxu0
    %151 = vdwg.mxu0
    %152 = vst [vmem:[#allocation2] sm:$0xff] %v144
    %153 = vst [vmem:[#allocation2 + $0x8] sm:$0xff] %v149
    // Predicated region
    $region10: #{segment_embedding.1} parent=1 // pred_check
      _
    $region11: #{segment_embedding.1} parent=1 // pred_check_branch
      %155 = sbr.rel (0) target = $region13
    $region12: #{segment_embedding.1} parent=1 // pred_region
      %s157 = ssub.s32 256, 256
      %158 = vsyncadd [#allocation3], %s157
      %s159 = sshll.u32 [#allocation2], 4
      %s160 = int_to_ptr.vmem [resolvable:$true] %s159
      %165 = dma.vmem_to_hbm [thread:$0]  %s160, 256, %s2, [#allocation3], 128, 128, 8
    $region13: #{segment_embedding.1} parent=1 // pred_fallthru
      _
    // Predicated region
    $region14: #{segment_embedding.1} parent=1 // pred_check
      _
    $region15: #{segment_embedding.1} parent=1 // pred_check_branch
      %167 = sbr.rel (0) target = $region17
    $region16: #{segment_embedding.1} parent=1 // pred_region
      %168 = dma.done [#allocation3], 256
    $region17: #{segment_embedding.1} parent=1 // pred_fallthru
      _
    %169 = vsyncpa [#allocation3], 1

</llo_original>
